<compile_context>
chip_gen: v7x
topology: tpu7x:2x2x1
jax: 0.10.0
libtpu: 0.0.40
codegen_flags: <defaults>
</compile_context>

<pallas_src>
import math
from functools import partial

import jax
import jax.numpy as jnp
from jax.experimental import pallas as pl
from jax.experimental.pallas import tpu as pltpu

MXU_DTYPE = jnp.bfloat16            # MXU operand dtype (accumulation stays float32)


def _tpu_budgets():
    """Generation-aware VMEM budget / tile targets (v7x: 64 MiB per TC, v5e/v6e: 128 MiB)."""
    try:
        cap = int(pltpu.get_tpu_info().vmem_capacity_bytes)
    except Exception:                               # no TPU visible / older API
        cap = 64 * 1024 * 1024
    if cap >= 100 * 1024 * 1024:                    # v5e / v6e (128 MiB parts)
        return 96 * 1024 * 1024, 512, 512
    return 40 * 1024 * 1024, 256, 256               # v7x (64 MiB per TensorCore)


VMEM_LIMIT, MAX_ROWS, LINEAR_TM = _tpu_budgets()


def _const_spec(block_shape):
    """Grid-invariant operand: whole array resident in VMEM, single-buffered."""
    n = len(block_shape)
    index_map = lambda *_: (0,) * n
    try:
        return pl.BlockSpec(block_shape, index_map, pipeline_mode=pl.Buffered(1))
    except (AttributeError, TypeError):             # older jax without pipeline_mode
        return pl.BlockSpec(block_shape, index_map)


def _pick_tb(bs, n_r, d):
    """Biggest batch block (divisor of bs) whose row slab fits the VMEM budget,
    capped at bs//2 so the 1-D 'parallel' grid keeps >=2 steps for v7x's two cores."""
    bytes_per_row = max(d, 1) * 4 * 18              # rough f32 intermediates + bf16 copies
    rows_cap = min(MAX_ROWS, max(n_r, VMEM_LIMIT // (2 * bytes_per_row)))
    cap = max(1, min(bs, rows_cap // n_r))
    if bs >= 2:
        cap = min(cap, bs // 2)
    tb = 1
    for c in range(1, cap + 1):
        if bs % c == 0:
            tb = c
    return tb


# --------------------------------------------------------------------------
# Generic fused linear:  y = act(x @ w + b)   (weight resident, single-buffered)
# --------------------------------------------------------------------------

def _linear_kernel(x_ref, w_ref, b_ref, o_ref, *, act):
    x = x_ref[...].astype(w_ref.dtype)
    y = jnp.dot(x, w_ref[...], preferred_element_type=jnp.float32) + b_ref[...]
    if act == "relu":
        y = jnp.maximum(y, 0.0)
    elif act == "sigmoid":
        y = jax.nn.sigmoid(y)
    o_ref[...] = y.astype(o_ref.dtype)


def pallas_linear(x2d, w, b, *, act="none", tm=None):
    """x2d: (M, K) f32, w: (K, N) bf16, b: (N,) f32 -> (M, N) f32."""
    M, K = x2d.shape
    Kw, N = w.shape
    assert K == Kw
    if tm is None:
        tm = LINEAR_TM
    if tm >= M:
        tm = M
        if M > 8:                                   # keep >=2 grid steps (v7x megacore)
            half = (M // 2) // 8 * 8
            if half >= 8:
                tm = half
    grid = (pl.cdiv(M, tm),)
    return pl.pallas_call(
        partial(_linear_kernel, act=act),
        out_shape=jax.ShapeDtypeStruct((M, N), jnp.float32),
        grid_spec=pltpu.PrefetchScalarGridSpec(
            num_scalar_prefetch=0,
            grid=grid,
            in_specs=[pl.BlockSpec((tm, K), lambda i: (i, 0)),
                      _const_spec((K, N)),
                      _const_spec((1, N))],
            out_specs=pl.BlockSpec((tm, N), lambda i: (i, 0))),
        compiler_params=pltpu.CompilerParams(
            dimension_semantics=("parallel",),
            vmem_limit_bytes=VMEM_LIMIT),
    )(x2d, w, b.reshape(1, N))


# --------------------------------------------------------------------------
# Fused AGSA block:
#   l2norm(fc, dim=1) -> pos = sigmoid(Linear(5,d)) -> x = fc*pos -> QKV ->
#   gated heads -> attention -> BN(folded into V) -> +fc residual
# also emits l2norm(out, dim=1) and mean(out, dim=1)
# --------------------------------------------------------------------------

def _agsa_kernel(fc_ref, posi_ref, posw_ref, posb_ref,
                 wqkv_ref, bqkv_ref, wgq_ref, bgq_ref, wgk_ref, bgk_ref,
                 wm_ref, bm_ref,
                 fcn_ref, att_ref, attn_ref, avg_ref, *, h, d_k):
    tb, n_r, d = fc_ref.shape
    cd = wqkv_ref.dtype
    rows = tb * n_r

    # fused l2norm over the region axis (reference l2norm(X, dim=1); no eps, as in the module)
    fc_raw = fc_ref[...]
    fc = fc_raw / jnp.sqrt(jnp.sum(fc_raw * fc_raw, axis=1, keepdims=True))
    fcn_ref[...] = fc.astype(fcn_ref.dtype)

    # fused PositionEncoder: sigmoid(Linear(5 -> d))
    posi = posi_ref[...].reshape(rows, posi_ref.shape[2]).astype(cd)
    pos = jax.nn.sigmoid(
        jnp.dot(posi, posw_ref[...], preferred_element_type=jnp.float32) + posb_ref[...])

    # QKV on the flattened row slab (single lane-dense matmul; agsa BN folded into W_v/b_v)
    x2 = fc.reshape(rows, d) * pos
    xc = x2.astype(cd)
    qkv = jnp.dot(xc, wqkv_ref[...], preferred_element_type=jnp.float32) + bqkv_ref[...]
    q, k, v = qkv[:, :d], qkv[:, d:2 * d], qkv[:, 2 * d:]

    # head-shared gate linears as block-diagonal full-width (d, d) matmuls;
    # cat([G, G]) @ Wfg is pre-summed into wm at trace time.
    gq = jnp.dot(q.astype(cd), wgq_ref[...], preferred_element_type=jnp.float32) + bgq_ref[...]
    gk = jnp.dot(k.astype(cd), wgk_ref[...], preferred_element_type=jnp.float32) + bgk_ref[...]
    G = (gq * gk).astype(cd)
    gate = jax.nn.sigmoid(jnp.dot(G, wm_ref[...], preferred_element_type=jnp.float32)
                          + bm_ref[...])

    # bf16 casts hoisted out of the head loop
    qg = (q * gate[:, :d]).reshape(tb, n_r, d).astype(cd)
    kg = (k * gate[:, d:]).reshape(tb, n_r, d).astype(cd)
    v3 = v.reshape(tb, n_r, d).astype(cd)

    # per-head attention: 3-D einsums batched over the tb axis (known-good lowering form);
    # head outputs are assembled in VMEM and written with ONE full-width store.
    scale = 1.0 / math.sqrt(d_k)
    heads = []
    for hh in range(h):                              # static unroll over heads
        sl = slice(hh * d_k, (hh + 1) * d_k)
        s = jnp.einsum('bik,bjk->bij', qg[:, :, sl], kg[:, :, sl],
                       preferred_element_type=jnp.float32) * scale
        p = jnp.exp(s - jnp.max(s, axis=-1, keepdims=True))
        p = p * pl.reciprocal(jnp.sum(p, axis=-1, keepdims=True), approx=True)
        heads.append(jnp.einsum('bij,bjk->bik', p.astype(cd), v3[:, :, sl],
                                preferred_element_type=jnp.float32))
    att = fc + jnp.concatenate(heads, axis=-1)       # residual (BN already folded into V path)
    att_ref[...] = att.astype(att_ref.dtype)
    attn_ref[...] = (att / jnp.sqrt(jnp.sum(att * att, axis=1, keepdims=True))
                     ).astype(attn_ref.dtype)
    avg_ref[...] = jnp.mean(att, axis=1, keepdims=True).astype(avg_ref.dtype)


def pallas_agsa(fc_raw, posi, pos_w, pos_b, wqkv, bqkv, wgq, bgq, wgk, bgk, wm, bm, *, h):
    bs, n_r, d = fc_raw.shape
    assert d % h == 0
    d_k = d // h
    tb = _pick_tb(bs, n_r, d)
    blk = lambda b: (b, 0, 0)
    out_blk = pl.BlockSpec((tb, n_r, d), blk)
    return pl.pallas_call(
        partial(_agsa_kernel, h=h, d_k=d_k),
        out_shape=(jax.ShapeDtypeStruct((bs, n_r, d), jnp.float32),   # l2norm(fc_img_emd)
                   jax.ShapeDtypeStruct((bs, n_r, d), jnp.float32),   # self_att_emb1
                   jax.ShapeDtypeStruct((bs, n_r, d), jnp.float32),   # l2norm(self_att_emb1)
                   jax.ShapeDtypeStruct((bs, 1, d), jnp.float32)),    # mean over regions
        grid_spec=pltpu.PrefetchScalarGridSpec(
            num_scalar_prefetch=0,
            grid=(bs // tb,),
            in_specs=[pl.BlockSpec((tb, n_r, d), blk),
                      pl.BlockSpec((tb, n_r, 5), blk),
                      _const_spec((5, d)),
                      _const_spec((1, d)),
                      _const_spec((d, 3 * d)),
                      _const_spec((1, 3 * d)),
                      _const_spec((d, d)),
                      _const_spec((1, d)),
                      _const_spec((d, d)),
                      _const_spec((1, d)),
                      _const_spec((d, 2 * d)),
                      _const_spec((1, 2 * d))],
            out_specs=[out_blk, out_blk, out_blk,
                       pl.BlockSpec((tb, 1, d), blk)]),
        compiler_params=pltpu.CompilerParams(
            dimension_semantics=("parallel",),
            vmem_limit_bytes=VMEM_LIMIT),
    )(fc_raw, posi, pos_w, pos_b, wqkv, bqkv, wgq, bgq, wgk, bgk, wm, bm)


# --------------------------------------------------------------------------
# Fused Summarization (dilated conv stack, channels-last, batched) + softmax pooling
# --------------------------------------------------------------------------

def _mvs_pool_kernel(emb_ref, w1_ref, b1_ref, w2_ref, b2_ref, w3t_ref, b3_ref,
                     smry_ref, pool_ref, *, pad1, dil1, pad2, dil2):
    tb, n_r, d = emb_ref.shape
    cd = w1_ref.dtype
    k1 = w1_ref.shape[0]
    c1ch = w1_ref.shape[2]
    k2 = w2_ref.shape[0]
    smry_k = w3t_ref.shape[1]
    rows = tb * n_r

    x = emb_ref[...]                                            # (tb, n_r, d) f32

    # conv1 (k=3, dil=1, pad=1): pad the whole batch block once along the region axis;
    # each tap is one flattened (tb*n_r, d) @ (d, d/2) MXU matmul (BN folded, ReLU fused).
    z1 = jnp.zeros((tb, pad1, d), jnp.float32)
    xp = jnp.concatenate([z1, x, z1], axis=1)
    acc1 = b1_ref[...]
    for tap in range(k1):
        xs = xp[:, tap * dil1: tap * dil1 + n_r, :].reshape(rows, d).astype(cd)
        acc1 = acc1 + jnp.dot(xs, w1_ref[tap], preferred_element_type=jnp.float32)
    c1 = jnp.maximum(acc1, 0.0)                                 # (rows, d/2)

    # conv2 (k=3, dil=2, pad=2)
    z2 = jnp.zeros((tb, pad2, c1ch), jnp.float32)
    c1p = jnp.concatenate([z2, c1.reshape(tb, n_r, c1ch), z2], axis=1)
    acc2 = b2_ref[...]
    for tap in range(k2):
        xs = c1p[:, tap * dil2: tap * dil2 + n_r, :].reshape(rows, c1ch).astype(cd)
        acc2 = acc2 + jnp.dot(xs, w2_ref[tap], preferred_element_type=jnp.float32)
    c2 = jnp.maximum(acc2, 0.0).astype(cd)                      # (rows, d/4)

    # conv3 is pointwise: one (rows, d/4) @ (d/4, k) matmul -> smry directly in (b, n_r, k)
    s = jnp.dot(c2, w3t_ref[...], preferred_element_type=jnp.float32) + b3_ref[...]
    s3 = s.reshape(tb, n_r, smry_k)
    smry_ref[...] = s3.astype(smry_ref.dtype)

    # softmax over the region axis (reference softmax(smry, dim=1)) + pooling L^T @ emb
    p = jnp.exp(s3 - jnp.max(s3, axis=1, keepdims=True))
    L = p * pl.reciprocal(jnp.sum(p, axis=1, keepdims=True), approx=True)   # (tb, n_r, k)
    Lt = jnp.swapaxes(L, 1, 2).astype(cd)                                   # (tb, k, n_r)
    pooled = jnp.einsum('bkr,brd->bkd', Lt, x.astype(cd),
                        preferred_element_type=jnp.float32)
    pool_ref[...] = pooled.astype(pool_ref.dtype)


def pallas_mvs_pool(emb, w1t, b1, w2t, b2, w3t, b3, *, dil1=1, pad1=1, dil2=2, pad2=2):
    """emb: (bs, n_r, d) f32 -> (smry (bs, n_r, k), pooled (bs, k, d))."""
    bs, n_r, d = emb.shape
    k1, _, c1 = w1t.shape
    k2, _, c2 = w2t.shape
    smry_k = w3t.shape[1]
    tb = _pick_tb(bs, n_r, d)
    blk = lambda b: (b, 0, 0)
    return pl.pallas_call(
        partial(_mvs_pool_kernel, pad1=pad1, dil1=dil1, pad2=pad2, dil2=dil2),
        out_shape=(jax.ShapeDtypeStruct((bs, n_r, smry_k), jnp.float32),
                   jax.ShapeDtypeStruct((bs, smry_k, d), jnp.float32)),
        grid_spec=pltpu.PrefetchScalarGridSpec(
            num_scalar_prefetch=0,
            grid=(bs // tb,),
            in_specs=[pl.BlockSpec((tb, n_r, d), blk),
                      _const_spec((k1, d, c1)),
                      _const_spec((1, c1)),
                      _const_spec((k2, c1, c2)),
                      _const_spec((1, c2)),
                      _const_spec((c2, smry_k)),
                      _const_spec((1, smry_k))],
            out_specs=[pl.BlockSpec((tb, n_r, smry_k), blk),
                       pl.BlockSpec((tb, smry_k, d), blk)]),
        compiler_params=pltpu.CompilerParams(
            dimension_semantics=("parallel",),
            vmem_limit_bytes=VMEM_LIMIT),
    )(emb, w1t, b1, w2t, b2, w3t, b3)


# --------------------------------------------------------------------------
# Plain-JAX glue (eval-mode BN / normalization / BN folding)
# --------------------------------------------------------------------------

def f_normalize(X, axis=-1, eps=1e-12):
    norm = jnp.sqrt(jnp.sum(X * X, axis=axis, keepdims=True))
    return X / jnp.maximum(norm, eps)


def _bn_fold(bn, eps=1e-5):
    gamma, beta, mean, var = bn
    s = gamma * jax.lax.rsqrt(var + eps)
    t = beta - mean * s
    return s, t


def bn_eval(x, bn, channel_axis=-1, eps=1e-5):
    s, t = _bn_fold(bn, eps)
    shape = [1] * x.ndim
    shape[channel_axis] = x.shape[channel_axis]
    return x * s.reshape(shape) + t.reshape(shape)


# --------------------------------------------------------------------------
# Parameter construction (deterministic, synthetic)
# --------------------------------------------------------------------------

def make_params(key, img_dim, embed_size, head, smry_k):
    d = embed_size
    d_k = d // head
    keys = iter(jax.random.split(key, 32))

    def u(shape, scale=0.1):
        return jax.random.uniform(next(keys), shape, jnp.float32, -scale, scale)

    def bn_default(c):
        return (jnp.ones((c,), jnp.float32), jnp.zeros((c,), jnp.float32),
                jnp.zeros((c,), jnp.float32), jnp.ones((c,), jnp.float32))

    r = math.sqrt(6.0) / math.sqrt(img_dim + d)  # xavier init as in init_weights()
    p = {
        "embed_size": d, "head": head, "smry_k": smry_k,
        "fc_w": jax.random.uniform(next(keys), (img_dim, d), jnp.float32, -r, r),
        "fc_b": jnp.zeros((d,), jnp.float32),
        "pos_w": u((5, d)), "pos_b": u((d,)),
        "agsa": (u((d, d)), u((d,)), u((d, d)), u((d,)), u((d, d)), u((d,)),
                 u((d_k, d_k)), u((d_k,)), u((d_k, d_k)), u((d_k,)),
                 u((2 * d_k, 2 * d_k)), u((2 * d_k,))),
        "agsa_bn": bn_default(d),
        "ctx_fc_w": u((d, d)), "ctx_fc_b": u((d,)),
        "ctx_bn1": bn_default(d), "ctx_bn2": bn_default(d),
        "conv1_w": u((d // 2, d, 3)), "conv1_b": u((d // 2,)), "conv1_bn": bn_default(d // 2),
        "conv2_w": u((d // 4, d // 2, 3)), "conv2_b": u((d // 4,)), "conv2_bn": bn_default(d // 4),
        "conv3_w": u((smry_k, d // 4, 1)), "conv3_b": u((smry_k,)),
        "fuse1_w": u((2 * d, d)), "fuse1_b": u((d,)),
        "fuse2_w": u((d, 1)), "fuse2_b": u((1,)),
    }
    return p


# --------------------------------------------------------------------------
# Forward pass (= EncoderImagePrecompSelfAttn.forward)
# --------------------------------------------------------------------------

def encoder_forward(params, images, boxes, imgs_wh, ctx_fc_relu):
    bs, n_r, img_dim = images.shape
    d = params["embed_size"]
    h = params["head"]
    d_k = d // h
    cd = MXU_DTYPE

    # ---- trace-time weight prep: BN folding + head-shared gate expansion (free) ----
    (wq, bq, wk, bk, wv, bv, wfq, bfq, wfk, bfk, wfg, bfg) = params["agsa"]
    s_bn, t_bn = _bn_fold(params["agsa_bn"])            # softmax rows sum to 1 -> fold into V
    wv_f = wv * s_bn[None, :]
    bv_f = bv * s_bn + t_bn
    wqkv = jnp.concatenate([wq, wk, wv_f], axis=1).astype(cd)          # (d, 3d)
    bqkv = jnp.concatenate([bq, bk, bv_f]).reshape(1, 3 * d)
    eye_h = jnp.eye(h, dtype=jnp.float32)
    wgq = jnp.kron(eye_h, wfq).astype(cd)                              # block-diag (d, d)
    bgq = jnp.tile(bfq, h).reshape(1, d)
    wgk = jnp.kron(eye_h, wfk).astype(cd)
    bgk = jnp.tile(bfk, h).reshape(1, d)
    wfg_sum = wfg[:d_k, :] + wfg[d_k:, :]                              # cat([G,G]) @ Wfg fold
    wm = jnp.concatenate([jnp.kron(eye_h, wfg_sum[:, :d_k]),
                          jnp.kron(eye_h, wfg_sum[:, d_k:])], axis=1).astype(cd)   # (d, 2d)
    bm = jnp.concatenate([jnp.tile(bfg[:d_k], h),
                          jnp.tile(bfg[d_k:], h)]).reshape(1, 2 * d)

    pos_w = params["pos_w"].astype(cd)                                 # fused into AGSA kernel
    pos_b = params["pos_b"].reshape(1, d)

    sc, tc = _bn_fold(params["ctx_bn1"])                               # ctx_bn1 -> ctx_fc
    ctx_w = (params["ctx_fc_w"] * sc[None, :]).astype(cd)
    ctx_b = params["ctx_fc_b"] * sc + tc

    s1, t1 = _bn_fold(params["conv1_bn"])                              # conv BNs -> conv weights
    w1t = (jnp.transpose(params["conv1_w"], (2, 1, 0)) * s1[None, None, :]).astype(cd)
    b1 = (params["conv1_b"] * s1 + t1).reshape(1, -1)
    s2, t2 = _bn_fold(params["conv2_bn"])
    w2t = (jnp.transpose(params["conv2_w"], (2, 1, 0)) * s2[None, None, :]).astype(cd)
    b2 = (params["conv2_b"] * s2 + t2).reshape(1, -1)
    w3t = jnp.transpose(params["conv3_w"][:, :, 0]).astype(cd)         # (d//4, k)
    b3 = params["conv3_b"].reshape(1, -1)

    # ---- fc projection (l2norm over regions fused into the AGSA prologue) ----
    fc_raw = pallas_linear(images.reshape(bs * n_r, img_dim),
                           params["fc_w"].astype(cd), params["fc_b"]).reshape(bs, n_r, d)

    # ---- PositionEncoder features (Linear(5,d)+sigmoid fused into the AGSA kernel) ----
    wh = jnp.concatenate([imgs_wh, imgs_wh], axis=-1)[:, None, :]      # (bs, 1, 4)
    nb = boxes / wh
    area = ((nb[..., 2] - nb[..., 0]) * (nb[..., 3] - nb[..., 1]))[..., None]
    posi = jnp.concatenate([nb, area], axis=-1)                        # (bs, n_r, 5)

    # ---- AGSA (num_layers=1): fused l2norm + pos-enc + gated self-attn + BN + residual ----
    fc_img_emd, self_att_emb1, self_att_emb, img_avg3 = pallas_agsa(
        fc_raw, posi, pos_w, pos_b, wqkv, bqkv, wgq, bgq, wgk, bgk, wm, bm, h=h)
    img_avg = img_avg3[:, 0, :]                                        # (bs, d)

    img_glo_guide = pallas_linear(img_avg, ctx_w, ctx_b,
                                  act="relu" if ctx_fc_relu else "none")
    self_att_emb2 = bn_eval(self_att_emb1, params["ctx_bn2"], channel_axis=-1)
    if ctx_fc_relu:
        self_att_emb2 = jax.nn.relu(self_att_emb2)

    # ---- Summarization (multi-view) + softmax pooling, fully fused & batched ----
    smry_mat, img_emb_mat = pallas_mvs_pool(self_att_emb, w1t, b1, w2t, b2, w3t, b3)

    # ---- Fusion gate (tiny; plain jnp per perf feedback) ----
    m = jnp.concatenate([img_avg, img_glo_guide], axis=-1)             # (bs, 2d)
    f1 = jax.nn.relu(m @ params["fuse1_w"] + params["fuse1_b"])
    g = jax.nn.sigmoid(f1 @ params["fuse2_w"] + params["fuse2_b"])     # (bs, 1)
    g = jnp.broadcast_to(g, (bs, d))
    img_ctx_fea = g * img_avg + (1.0 - g) * img_glo_guide

    return (f_normalize(img_emb_mat, axis=-1),
            smry_mat,
            f_normalize(fc_img_emd, axis=-1),
            f_normalize(img_glo_guide, axis=-1),
            f_normalize(self_att_emb2, axis=-1),
            f_normalize(img_ctx_fea, axis=-1),
            fc_img_emd,
            self_att_emb)


# --------------------------------------------------------------------------
# Driver
# --------------------------------------------------------------------------

if __name__ == "__main__":
    bs, n_r, img_dim = 2, 8, 48
    embed_size, head, smry_k = 32, 2, 6

    key = jax.random.PRNGKey(0)
    k_param, k_img, k_box = jax.random.split(key, 3)

    params = make_params(k_param, img_dim, embed_size, head, smry_k)

    images = jax.random.normal(k_img, (bs, n_r, img_dim), jnp.float32)
    imgs_wh = jnp.array([[640.0, 480.0], [800.0, 600.0]], jnp.float32)     # (bs, 2)
    # build well-formed boxes: x1<x2, y1<y2 inside the image
    kb1, kb2 = jax.random.split(k_box)
    xy1 = jax.random.uniform(kb1, (bs, n_r, 2)) * 0.4 * imgs_wh[:, None, :]
    wh_box = (0.1 + 0.4 * jax.random.uniform(kb2, (bs, n_r, 2))) * imgs_wh[:, None, :]
    boxes = jnp.concatenate([xy1, jnp.minimum(xy1 + wh_box, imgs_wh[:, None, :])], axis=-1)

    outs = encoder_forward(params, images, boxes, imgs_wh, ctx_fc_relu=True)
    outs = jax.block_until_ready(outs)

    expected_shapes = [
        (bs, smry_k, embed_size),   # normalized img_emb_mat
        (bs, n_r, smry_k),          # smry_mat
        (bs, n_r, embed_size),      # normalized fc_img_emd
        (bs, embed_size),           # normalized img_glo_guide
        (bs, n_r, embed_size),      # normalized self_att_emb2
        (bs, embed_size),           # normalized img_ctx_fea
        (bs, n_r, embed_size),      # fc_img_emd
        (bs, n_r, embed_size),      # self_att_emb
    ]
    assert len(outs) == 8
    for o, s in zip(outs, expected_shapes):
        assert o.shape == s, (o.shape, s)
        assert bool(jnp.all(jnp.isfinite(o)))

    print("KERNEL_OK")
</pallas_src>

<mosaic_0001>
module attributes {stable_mosaic.version = 11 : i64} {
  func.func @_linear_kernel(%arg0: i32, %arg1: memref<8x48xf32, #tpu.memory_space<vmem>>, %arg2: memref<48x32xbf16, #tpu.memory_space<vmem>>, %arg3: memref<1x32xf32, #tpu.memory_space<vmem>>, %arg4: memref<8x32xf32, #tpu.memory_space<vmem>>) attributes {dimension_semantics = [#tpu.dimension_semantics<parallel>], iteration_bounds = array<i64: 2>, scalar_prefetch = 0 : i64, scratch_operands = 0 : i64, tpu.core_type = #tpu.core_type<tc>, window_params = [{transform_indices = @transform_0, window_bounds = array<i64: 8, 48>}, {pipeline_mode = #tpu.pipeline_mode<synchronous>, transform_indices = @transform_1, window_bounds = array<i64: 48, 32>}, {pipeline_mode = #tpu.pipeline_mode<synchronous>, transform_indices = @transform_2, window_bounds = array<i64: 1, 32>}, {transform_indices = @transform_3, window_bounds = array<i64: 8, 32>}]} {
    %c0 = arith.constant 0 : index
    %c0_0 = arith.constant 0 : index
    %0 = vector.load %arg1[%c0, %c0_0] : memref<8x48xf32, #tpu.memory_space<vmem>>, vector<8x48xf32>
    %1 = arith.truncf %0 : vector<8x48xf32> to vector<8x48xbf16>
    %c0_1 = arith.constant 0 : index
    %c0_2 = arith.constant 0 : index
    %2 = vector.load %arg2[%c0_1, %c0_2] : memref<48x32xbf16, #tpu.memory_space<vmem>>, vector<48x32xbf16>
    %cst = arith.constant dense<0.000000e+00> : vector<8x32xf32>
    %3 = tpu.matmul %1, %2, %cst {dimension_numbers = #tpu.dot_dimension_numbers<[1], [0], [0], [1], [0, 0, 1, 1], [], []>} : vector<8x48xbf16>, vector<48x32xbf16>, vector<8x32xf32> -> vector<8x32xf32>
    %c0_3 = arith.constant 0 : index
    %c0_4 = arith.constant 0 : index
    %4 = vector.load %arg3[%c0_3, %c0_4] : memref<1x32xf32, #tpu.memory_space<vmem>>, vector<1x32xf32>
    %5 = vector.broadcast %4 : vector<1x32xf32> to vector<8x32xf32>
    %6 = arith.addf %3, %5 : vector<8x32xf32>
    %c0_5 = arith.constant 0 : index
    %c0_6 = arith.constant 0 : index
    %7 = vector.load %arg4[%c0_5, %c0_6] : memref<8x32xf32, #tpu.memory_space<vmem>>, vector<8x32xf32>
    tpu.vector_store %arg4[%c0_5, %c0_6], %6 {strides = array<i32>} : memref<8x32xf32, #tpu.memory_space<vmem>>, vector<8x32xf32>,
    return
  }
  func.func @transform_0(%arg0: i32) -> (i32, i32) {
    %c0_i32 = arith.constant 0 : i32
    %c0_i32_0 = arith.constant 0 : i32
    return %arg0, %c0_i32 : i32, i32
  }
  func.func @transform_1(%arg0: i32) -> (i32, i32) {
    %c0_i32 = arith.constant 0 : i32
    %c0_i32_0 = arith.constant 0 : i32
    %c0_i32_1 = arith.constant 0 : i32
    return %c0_i32, %c0_i32_0 : i32, i32
  }
  func.func @transform_2(%arg0: i32) -> (i32, i32) {
    %c0_i32 = arith.constant 0 : i32
    %c0_i32_0 = arith.constant 0 : i32
    %c0_i32_1 = arith.constant 0 : i32
    return %c0_i32, %c0_i32_0 : i32, i32
  }
  func.func @transform_3(%arg0: i32) -> (i32, i32) {
    %c0_i32 = arith.constant 0 : i32
    %c0_i32_0 = arith.constant 0 : i32
    return %arg0, %c0_i32 : i32, i32
  }
}

</mosaic_0001>

<llo_original>
// kernel: tpu_custom_call.1
$region0: #{tpu_custom_call.1}
  #allocation0 [shape = 'u32[]', space=smem, size = 0x4, offset = 0x4, fixed_abs, tag = 'smem constant byte address 0x4 - core index']
  #allocation1 [shape = 'u32[144,128]{1,0:T(1,128)}', space=vmem, size = 0x12000, scoped, tag = 'internal scratch']
  %s0 = inlined_call_operand.vmem [shape: f32[16,48], index: 0, kind: input, shape index: {}]
  %s1 = inlined_call_operand.vmem [shape: bf16[48,32], index: 1, kind: input, shape index: {}]
  %s2 = inlined_call_operand.vmem [shape: f32[1,32], index: 2, kind: input, shape index: {}]
  %s3 = inlined_call_operand.hbm [shape: f32[16,32], index: 3, kind: output, shape index: {}]
  %s4 = sld [smem:[#allocation0]]
  $region45: #{tpu_custom_call.1} parent=0
    _
  %s6 = ssub.s32 1, %s4
  %s7 = scalar_select 0, %s6, %s4
  $region1: #{tpu_custom_call.1} parent=0
    #allocation2 [shape = 'u8[8192]{0}', space=vmem, size = 0x2000, scoped, tag = 'output window, operand 0']
    #allocation3 [shape = 's32[2]{0}', space=sflag, size = 0x8, scoped, tag = 'scoped memory for tpu_custom_call.1']
    %8 = vsyncpa [#allocation3], 0
    %s9 = scalar_lea.sflag [#allocation3], 1
    %10 = vsyncpa %s9, 0
    loop: start=0, step=1, limit=4
    $region2: #{tpu_custom_call.1} parent=1 // loop_pre_header
      _
    $region3: #{tpu_custom_call.1} parent=1 // loop_header
      %s12 = sphi 0, %s16
      %p13 = scmp.ge.s32.totalorder %s12, 4
      %s22 = sphi 0, %s24
      %s25 = sphi 0, %s22
      %s26 = sphi 0, %s25
      %s42 = sphi 0, %s26
      %s46 = sphi 0, %s46
      %s48 = sphi 0, %s46
      %s49 = sphi 0, %s48
      %s63 = sphi 0, %s49
      %s67 = sphi 0, %s67
      %s69 = sphi 0, %s67
      %s70 = sphi 0, %s69
      %s84 = sphi 0, %s70
      %s90 = sphi 0, %s92
      %s93 = sphi 0, %s90
      %s94 = sphi 0, %s93
      %s110 = sphi 0, %s94
    $region4: #{tpu_custom_call.1} parent=1 // loop_header_branch
      %15 = sbr.rel (%p13) target = $region8
    $region5: #{tpu_custom_call.1} parent=1 // loop_body
      %s17 = ssub.s32 %s12, 1
      %s18 = ssub.s32 %s12, 2
      %s19 = sadd.s32 %s12, 1
      %s20 = ssub.s32 %s12, %s19
      %p21 = scmp.eq.s32.totalorder %s20, 0
      %s23 = sadd.s32 %s22, 1
      %s24 = scalar_select %p21, %s22, %s23
      %p27 = pneg %p21
      %p28 = scmp.eq.s32.totalorder %s12, 1
      %p29 = por %p27, %p28
      %p30 = scmp.ne.s32.totalorder %s22, %s25
      %p31 = scmp.eq.s32.totalorder %s12, 0
      %p32 = por %p30, %p31
      %p33 = scmp.ne.s32.totalorder %s22, %s25
      %p34 = scmp.eq.s32.totalorder %s17, 1
      %p35 = por %p33, %p34
      %p36 = scmp.ne.s32.totalorder %s25, %s26
      %p37 = scmp.eq.s32.totalorder %s17, 0
      %p38 = por %p36, %p37
      %p39 = scmp.ne.s32.totalorder %s25, %s26
      %p40 = scmp.eq.s32.totalorder %s18, 1
      %p41 = por %p39, %p40
      %p43 = scmp.ne.s32.totalorder %s26, %s42
      %p44 = scmp.eq.s32.totalorder %s18, 0
      %p45 = por %p43, %p44
      %s47 = sadd.s32 %s46, 1
      %p50 = scmp.eq.s32.totalorder %s12, 1
      %p51 = scmp.ne.s32.totalorder %s46, %s48
      %p52 = scmp.eq.s32.totalorder %s12, 0
      %p53 = por %p51, %p52
      %p54 = scmp.ne.s32.totalorder %s46, %s48
      %p55 = scmp.eq.s32.totalorder %s17, 1
      %p56 = por %p54, %p55
      %p57 = scmp.ne.s32.totalorder %s48, %s49
      %p58 = scmp.eq.s32.totalorder %s17, 0
      %p59 = por %p57, %p58
      %p60 = scmp.ne.s32.totalorder %s48, %s49
      %p61 = scmp.eq.s32.totalorder %s18, 1
      %p62 = por %p60, %p61
      %p64 = scmp.ne.s32.totalorder %s49, %s63
      %p65 = scmp.eq.s32.totalorder %s18, 0
      %p66 = por %p64, %p65
      %s68 = sadd.s32 %s67, 1
      %p71 = scmp.eq.s32.totalorder %s12, 1
      %p72 = scmp.ne.s32.totalorder %s67, %s69
      %p73 = scmp.eq.s32.totalorder %s12, 0
      %p74 = por %p72, %p73
      %p75 = scmp.ne.s32.totalorder %s67, %s69
      %p76 = scmp.eq.s32.totalorder %s17, 1
      %p77 = por %p75, %p76
      %p78 = scmp.ne.s32.totalorder %s69, %s70
      %p79 = scmp.eq.s32.totalorder %s17, 0
      %p80 = por %p78, %p79
      %p81 = scmp.ne.s32.totalorder %s69, %s70
      %p82 = scmp.eq.s32.totalorder %s18, 1
      %p83 = por %p81, %p82
      %p85 = scmp.ne.s32.totalorder %s70, %s84
      %p86 = scmp.eq.s32.totalorder %s18, 0
      %p87 = por %p85, %p86
      %s88 = ssub.s32 %s12, %s19
      %p89 = scmp.eq.s32.totalorder %s88, 0
      %s91 = sadd.s32 %s90, 1
      %s92 = scalar_select %p89, %s90, %s91
      %p95 = pneg %p89
      %p96 = scmp.eq.s32.totalorder %s12, 1
      %p97 = por %p95, %p96
      %p98 = scmp.ne.s32.totalorder %s90, %s93
      %p99 = scmp.eq.s32.totalorder %s12, 0
      %p100 = por %p98, %p99
      %p101 = scmp.ne.s32.totalorder %s90, %s93
      %p102 = scmp.eq.s32.totalorder %s17, 1
      %p103 = por %p101, %p102
      %p104 = scmp.ne.s32.totalorder %s93, %s94
      %p105 = scmp.eq.s32.totalorder %s17, 0
      %p106 = por %p104, %p105
      %p107 = scmp.ne.s32.totalorder %s93, %s94
      %p108 = scmp.eq.s32.totalorder %s18, 1
      %p109 = por %p107, %p108
      %p111 = scmp.ne.s32.totalorder %s94, %s110
      %p112 = scmp.eq.s32.totalorder %s18, 0
      %p113 = por %p111, %p112
      %p114 = scmp.le.s32.totalorder 1, %s12
      %p115 = scmp.lt.s32.totalorder %s12, 3
      %p116 = pnand %p114, %p115
      %p117 = pneg %p116
      // Predicated region
      $region9: #{tpu_custom_call.1} parent=5 // pred_check
        _
      $region10: #{tpu_custom_call.1} parent=5 // pred_check_branch
        %119 = sbr.rel (%p116) target = $region12
      $region11: #{tpu_custom_call.1} parent=5 // pred_region
        %s120 = ssub.s32 %s12, 1
        // Predicated region
        $region13: #{tpu_custom_call.1} parent=11 // pred_check
          %p121 = pneg %p59
        $region14: #{tpu_custom_call.1} parent=11 // pred_check_branch
          %123 = sbr.rel (%p121) target = $region16
        $region15: #{tpu_custom_call.1} parent=11 // pred_region
          _
        $region16: #{tpu_custom_call.1} parent=11 // pred_fallthru
          _
        // Predicated region
        $region17: #{tpu_custom_call.1} parent=11 // pred_check
          %p124 = pneg %p80
        $region18: #{tpu_custom_call.1} parent=11 // pred_check_branch
          %126 = sbr.rel (%p124) target = $region20
        $region19: #{tpu_custom_call.1} parent=11 // pred_region
          _
        $region20: #{tpu_custom_call.1} parent=11 // pred_fallthru
          _
      $region12: #{tpu_custom_call.1} parent=5 // pred_fallthru
        _
      %p127 = scmp.lt.s32.totalorder %s12, 2
      // Predicated region
      $region21: #{tpu_custom_call.1} parent=5 // pred_check
        %p128 = pneg %p127
      $region22: #{tpu_custom_call.1} parent=5 // pred_check_branch
        %130 = sbr.rel (%p128) target = $region24
      $region23: #{tpu_custom_call.1} parent=5 // pred_region
        // Predicated region
        $region25: #{tpu_custom_call.1} parent=23 // pred_check
          %p131 = pneg %p32
        $region26: #{tpu_custom_call.1} parent=23 // pred_check_branch
          %133 = sbr.rel (%p131) target = $region28
        $region27: #{tpu_custom_call.1} parent=23 // pred_region
          %p134 = scmp.lt.s32.totalorder %s12, 1
          %s135 = scalar_select %p134, %s12, 1
          %s136 = smul.addr %s135, 8
          %s137 = scalar_lea.vmem %s0, %s136
        $region28: #{tpu_custom_call.1} parent=23 // pred_fallthru
          _
      $region24: #{tpu_custom_call.1} parent=5 // pred_fallthru
        _
      %p138 = scmp.le.s32.totalorder 1, %s12
      %p139 = scmp.lt.s32.totalorder %s12, 3
      %p140 = pnand %p138, %p139
      %p141 = pneg %p140
      // Predicated region
      $region29: #{tpu_custom_call.1} parent=5 // pred_check
        _
      $region30: #{tpu_custom_call.1} parent=5 // pred_check_branch
        %143 = sbr.rel (%p140) target = $region32
      $region31: #{tpu_custom_call.1} parent=5 // pred_region
        %s144 = ssub.s32 %s12, 1
        %p145 = scmp.lt.s32.totalorder %s17, 1
        %s146 = scalar_select %p145, %s17, 1
        %s147 = smul.addr %s146, 8
        %s148 = scalar_lea.vmem %s0, %s147
        %p149 = pneg %p38
        %p150 = pneg %p35
        %p151 = pneg %p59
        %p152 = pneg %p56
        %p153 = pneg %p80
        %p154 = pneg %p77
        %p155 = pneg %p106
        %p156 = pneg %p103
        %s157 = sand.u32 %s93, 1
        %s158 = scalar_lea.sflag [#allocation3], %s157
        %s159 = sand.u32 %s93, 1
        %s160 = smul.addr %s159, 8
        %s161 = scalar_lea.vmem [#allocation2], %s160
        %p162 = scmp.lt.s32.totalorder %s17, 1
        %s163 = scalar_select %p162, %s17, 1
        %s164 = smul.addr %s163, 8
        %s165 = scalar_lea.vmem %s0, %s164
        %v167 = vld [vmem:[%s165] sm:$0xff]
        %v168 = vpack.c.bf16 %v167, %v167
        %v169 = vld [vmem:[%s1] sm:$0xf]
        %v170 = vld [vmem:[%s1 + $0x4] sm:$0xf]
        %v171 = vld [vmem:[%s1 + $0x8] sm:$0xf]
        %v172 = vld [vmem:[%s1 + $0xc] sm:$0xf]
        %v173 = vld [vmem:[%s1 + $0x10] sm:$0xf]
        %v174 = vld [vmem:[%s1 + $0x14] sm:$0xf]
        %v175 = vld [vmem:[%s2] sm:$0x1]
        %v177 = vlaneseq
        %v178 = vshrl.u32 %v177, 7
        %v179 = vsub.s32 0, %v178
        %v180 = vrot.slane %v175, %v179
        %v188 = vunpack.c.l.b16 %v169
        %v189 = vunpack.c.l.b16 %v170
        %v190 = vunpack.c.l.b16 %v171
        %v191 = vunpack.c.l.b16 %v172
        %v192 = vunpack.c.l.b16 %v173
        %v193 = vunpack.c.l.b16 %v174
        %v194 = vpack.c.b16 %v189, %v188
        %v195 = vpack.c.b16 %v191, %v190
        %v196 = vpack.c.b16 %v193, %v192
        %vm200 = vcmask 392192
        %v202 = vsel %vm200, %v168, 0
        %204 = vmatprep.subr.bf16.mxu0 0
        %205 = vmatpush1.bf16.msra.mxu0 %v194
        %206 = vmatprep.subr.bf16.mxu0 0
        %207 = vmatpush1.bf16.msra.mxu0 %v195
        %208 = vmatprep.subr.bf16.mxu0 0
        %209 = vmatpush1.bf16.msra.mxu0 %v196
        %210 = vmatprep.subr.bf16.mxu0 0
        %211 = vmatpush1.bf16.msra.mxu0 0
        %212 = vmatprep.subr.bf16.mxu0 0
        %213 = vmatpush1.bf16.msra.mxu0 0
        %214 = vmatprep.subr.bf16.mxu0 0
        %215 = vmatpush1.bf16.msra.mxu0 0
        %216 = vmatprep.subr.bf16.mxu0 0
        %217 = vmatpush1.bf16.msra.mxu0 0
        %218 = vmatprep.subr.bf16.mxu0 0
        %219 = vmatpush1.bf16.msra.mxu0 0
        %220 = vmatprep.subr.bf16.mxu0 0
        %221 = vmatpush1.bf16.msra.mxu0 0
        %222 = vmatprep.subr.bf16.mxu0 0
        %223 = vmatpush1.bf16.msra.mxu0 0
        %224 = vmatprep.subr.bf16.mxu0 0
        %225 = vmatpush1.bf16.msra.mxu0 0
        %226 = vmatprep.subr.bf16.mxu0 0
        %227 = vmatpush1.bf16.msra.mxu0 0
        %228 = vmatprep.subr.bf16.mxu0 0
        %229 = vmatpush1.bf16.msra.mxu0 0
        %230 = vmatprep.subr.bf16.mxu0 0
        %231 = vmatpush1.bf16.msra.mxu0 0
        %232 = vmatprep.subr.bf16.mxu0 0
        %233 = vmatpush1.bf16.msra.mxu0 0
        %234 = vmatprep.subr.bf16.mxu0 0
        %235 = vmatpush1.bf16.msra.mxu0 0
        %236 = vmatprep.mubr.bf16.mxu0 0
        %237 = vmatmul.mubr.bf16.gmra.mrb[0].mxu0 %v202
        %v238 = vpop.f32.mrb[0].mxu0
        %v239 = vadd.f32 %v180, %v238
        %v240 = vpop.f32.mrb[0].mxu0
        %v241 = vpop.f32.mrb[0].mxu0
        %v242 = vpop.f32.mrb[0].mxu0
        %243 = vdwg.mxu0
        %vm244 = vcmask 261120
        %245 = vst.msk [vmem:[%s161] sm:$0xff] %vm244, %v239
        %s246 = sand.u32 %s93, 1
        %s247 = scalar_lea.sflag [#allocation3], %s246
        %s248 = sand.u32 %s93, 1
        %s249 = smul.addr %s248, 8
        %s250 = scalar_lea.vmem [#allocation2], %s249
        // Predicated region
        $region33: #{tpu_custom_call.1} parent=31 // pred_check
          %p251 = pneg %p103
        $region34: #{tpu_custom_call.1} parent=31 // pred_check_branch
          %253 = sbr.rel (%p251) target = $region36
        $region35: #{tpu_custom_call.1} parent=31 // pred_region
          %s255 = ssub.s32 128, 128
          %256 = vsyncadd %s247, %s255
          %s257 = smul.addr %s17, 128
          %s258 = scalar_lea.hbm %s3, %s257
          %s260 = sshll.u32 %s250, 4
          %s261 = int_to_ptr.vmem [resolvable:$true] %s260
          %263 = dma.vmem_to_hbm [thread:$0]  %s261, 128, %s258, %s247
        $region36: #{tpu_custom_call.1} parent=31 // pred_fallthru
          _
      $region32: #{tpu_custom_call.1} parent=5 // pred_fallthru
        _
      %p264 = scmp.le.s32.totalorder 2, %s12
      // Predicated region
      $region37: #{tpu_custom_call.1} parent=5 // pred_check
        %p265 = pneg %p264
      $region38: #{tpu_custom_call.1} parent=5 // pred_check_branch
        %267 = sbr.rel (%p265) target = $region40
      $region39: #{tpu_custom_call.1} parent=5 // pred_region
        %s268 = ssub.s32 %s12, 2
        // Predicated region
        $region41: #{tpu_custom_call.1} parent=39 // pred_check
          %p269 = pneg %p109
        $region42: #{tpu_custom_call.1} parent=39 // pred_check_branch
          %271 = sbr.rel (%p269) target = $region44
        $region43: #{tpu_custom_call.1} parent=39 // pred_region
          %s272 = sand.u32 %s94, 1
          %s273 = scalar_lea.sflag [#allocation3], %s272
          %s274 = sand.u32 %s94, 1
          %s275 = smul.addr %s274, 8
          %s276 = scalar_lea.vmem [#allocation2], %s275
          %277 = dma.done %s273, 128
        $region44: #{tpu_custom_call.1} parent=39 // pred_fallthru
          _
      $region40: #{tpu_custom_call.1} parent=5 // pred_fallthru
        _
    $region6: #{tpu_custom_call.1} parent=1 // loop_footer
      %s16 = sadd.s32 1, %s12
    $region7: #{tpu_custom_call.1} parent=1 // loop_footer_branch
      %11 = sbr.rel target = $region3
    $region8: #{tpu_custom_call.1} parent=1 // loop_exit
      _
    %278 = vsyncpa [#allocation3], 1
    %s279 = scalar_lea.sflag [#allocation3], 1
    %280 = vsyncpa %s279, 1

</llo_original>
